<compile_context>
chip_gen: v7x
topology: tpu7x:2x2x1
jax: 0.10.0
libtpu: 0.0.40
codegen_flags: <defaults>
</compile_context>

<pallas_src>
import jax
import jax.numpy as jnp
from jax.experimental import pallas as pl
from jax.experimental.pallas import tpu as pltpu


def _patch_embed_kernel(p_ref, w_ref, add_ref, o_ref):
    # p_ref:   (1, T, K)  zero-prepended im2col patches for this batch element
    # w_ref:   (K, E)     conv weight in matmul layout (same block every step)
    # add_ref: (T, E)     fused epilogue: row 0 = cls + pos[0], rows 1.. = bias + pos[1..]
    # o_ref:   (1, T, E)  output token embeddings for this batch element
    y = jnp.dot(p_ref[0], w_ref[...], preferred_element_type=jnp.float32)
    o_ref[0] = (y + add_ref[...].astype(jnp.float32)).astype(o_ref.dtype)


def vit_patch_embedding_forward(x, conv_weight, conv_bias, cls_token, positions):
    """Pallas implementation of ViTPatchEmbedding.forward.

    Args:
      x:           (b, C, H, W) image, NCHW.
      conv_weight: (E, C, P, P) Conv2d weight (kernel=stride=P).
      conv_bias:   (E,) Conv2d bias.
      cls_token:   (1, 1, E) ViTTokens parameter.
      positions:   (1 + (H//P)*(W//P), E) position embedding.

    Returns:
      (b, 1 + (H//P)*(W//P), E) token embeddings.
    """
    b, c, H, W = x.shape
    e, _, p, _ = conv_weight.shape
    h, w = H // p, W // p
    n = h * w            # number of patch tokens
    t = n + 1            # + cls token
    k = c * p * p        # reduction dim of the conv-as-matmul

    # TODO(synk): patch extraction (im2col) is done here as a wrapper-side XLA
    # reshape/transpose rather than inside the kernel (no clean in-kernel
    # equivalent without expensive relayouts for this layout).
    # (b, C, H, W) -> (b, h, w, C, P, P) -> (b, N, K), K ordered (c, pi, pj)
    # to match conv_weight.reshape(E, C*P*P).
    patches = x.reshape(b, c, h, p, w, p)
    patches = patches.transpose(0, 2, 4, 1, 3, 5).reshape(b, n, k)
    # Prepend one zero row per batch element so the GEMM output has T rows:
    # row 0 of the product is exactly 0 and picks up the cls token from add_mat.
    patches_ext = jnp.pad(patches, ((0, 0), (1, 0), (0, 0)))

    # Conv weight in matmul layout (K, E); K ordering matches the im2col above.
    w_ke = conv_weight.reshape(e, k).T.astype(x.dtype)

    # Fused additive epilogue (independent of batch, computed once):
    #   add_mat[0]   = cls_token + positions[0]
    #   add_mat[1:]  = conv_bias + positions[1:]
    add_mat = (
        jnp.concatenate(
            [cls_token.reshape(1, e),
             jnp.broadcast_to(conv_bias.reshape(1, e), (n, e))],
            axis=0,
        )
        + positions
    ).astype(jnp.float32)

    out = pl.pallas_call(
        _patch_embed_kernel,
        out_shape=jax.ShapeDtypeStruct((b, t, e), x.dtype),
        grid=(b,),
        in_specs=[
            pl.BlockSpec((1, t, k), lambda i: (i, 0, 0)),   # per-batch patches
            pl.BlockSpec((k, e), lambda i: (0, 0)),          # shared weight
            pl.BlockSpec((t, e), lambda i: (0, 0)),          # shared epilogue
        ],
        out_specs=pl.BlockSpec((1, t, e), lambda i: (i, 0, 0)),
        compiler_params=pltpu.CompilerParams(
            dimension_semantics=("parallel",)
        ),
    )(patches_ext, w_ke, add_mat)
    return out


if __name__ == "__main__":
    key = jax.random.PRNGKey(0)
    k_w, k_b, k_cls, k_pos, k_x = jax.random.split(key, 5)

    batch, channels, spatial = 2, 4, 16
    patch_size, embed_dim = 4, 32
    n_patches = (spatial // patch_size) ** 2     # 16
    n_tokens = n_patches + 1                     # 17

    conv_weight = 0.1 * jax.random.normal(
        k_w, (embed_dim, channels, patch_size, patch_size), jnp.float32)
    conv_bias = 0.1 * jax.random.normal(k_b, (embed_dim,), jnp.float32)
    cls_token = jax.random.normal(k_cls, (1, 1, embed_dim), jnp.float32)
    positions = jax.random.normal(k_pos, (n_tokens, embed_dim), jnp.float32)
    x = jax.random.normal(k_x, (batch, channels, spatial, spatial), jnp.float32)

    out = vit_patch_embedding_forward(x, conv_weight, conv_bias, cls_token,
                                      positions)
    out = jax.block_until_ready(out)

    # --- plain-JAX reference (independent path via lax.conv) ---
    conv = jax.lax.conv_general_dilated(
        x, conv_weight, window_strides=(patch_size, patch_size),
        padding="VALID", dimension_numbers=("NCHW", "OIHW", "NCHW"),
        precision=jax.lax.Precision.HIGHEST)               # (b, E, h, w)
    conv = conv.reshape(batch, embed_dim, n_patches).transpose(0, 2, 1)
    conv = conv + conv_bias.reshape(1, 1, embed_dim)
    cls_b = jnp.broadcast_to(cls_token, (batch, 1, embed_dim))
    ref = jnp.concatenate([cls_b, conv], axis=1) + positions[None]

    assert out.shape == (batch, n_tokens, embed_dim)
    assert out.dtype == x.dtype
    assert bool(jnp.allclose(out, ref, rtol=1e-2, atol=1e-2))

    print("KERNEL_OK")
</pallas_src>

<mosaic_0001>
module attributes {stable_mosaic.version = 11 : i64} {
  func.func @_patch_embed_kernel(%arg0: i32, %arg1: memref<1x17x64xf32, #tpu.memory_space<vmem>>, %arg2: memref<64x32xf32, #tpu.memory_space<vmem>>, %arg3: memref<17x32xf32, #tpu.memory_space<vmem>>, %arg4: memref<1x17x32xf32, #tpu.memory_space<vmem>>) attributes {dimension_semantics = [#tpu.dimension_semantics<parallel>], iteration_bounds = array<i64: 2>, scalar_prefetch = 0 : i64, scratch_operands = 0 : i64, tpu.core_type = #tpu.core_type<tc>, window_params = [{transform_indices = @transform_0, window_bounds = array<i64: 1, 17, 64>}, {pipeline_mode = #tpu.pipeline_mode<synchronous>, transform_indices = @transform_1, window_bounds = array<i64: 64, 32>}, {pipeline_mode = #tpu.pipeline_mode<synchronous>, transform_indices = @transform_2, window_bounds = array<i64: 17, 32>}, {transform_indices = @transform_3, window_bounds = array<i64: 1, 17, 32>}]} {
    %c0 = arith.constant 0 : index
    %c0_0 = arith.constant 0 : index
    %c0_1 = arith.constant 0 : index
    %0 = vector.load %arg1[%c0, %c0_0, %c0_1] : memref<1x17x64xf32, #tpu.memory_space<vmem>>, vector<1x17x64xf32>
    %1 = vector.shape_cast %0 : vector<1x17x64xf32> to vector<17x64xf32>
    %c0_2 = arith.constant 0 : index
    %c0_3 = arith.constant 0 : index
    %2 = vector.load %arg2[%c0_2, %c0_3] : memref<64x32xf32, #tpu.memory_space<vmem>>, vector<64x32xf32>
    %cst = arith.constant dense<0.000000e+00> : vector<17x32xf32>
    %3 = tpu.matmul %1, %2, %cst {dimension_numbers = #tpu.dot_dimension_numbers<[1], [0], [0], [1], [0, 0, 1, 1], [], []>} : vector<17x64xf32>, vector<64x32xf32>, vector<17x32xf32> -> vector<17x32xf32>
    %c0_4 = arith.constant 0 : index
    %c0_5 = arith.constant 0 : index
    %4 = vector.load %arg3[%c0_4, %c0_5] : memref<17x32xf32, #tpu.memory_space<vmem>>, vector<17x32xf32>
    %5 = arith.addf %3, %4 : vector<17x32xf32>
    %c0_6 = arith.constant 0 : index
    %c0_7 = arith.constant 0 : index
    %c0_8 = arith.constant 0 : index
    %6 = vector.load %arg4[%c0_6, %c0_7, %c0_8] : memref<1x17x32xf32, #tpu.memory_space<vmem>>, vector<1x17x32xf32>
    %7 = vector.shape_cast %6 : vector<1x17x32xf32> to vector<17x32xf32>
    %8 = vector.shape_cast %5 : vector<17x32xf32> to vector<1x17x32xf32>
    tpu.vector_store %arg4[%c0_6, %c0_7, %c0_8], %8 {strides = array<i32>} : memref<1x17x32xf32, #tpu.memory_space<vmem>>, vector<1x17x32xf32>,
    return
  }
  func.func @transform_0(%arg0: i32) -> (i32, i32, i32) {
    %c0_i32 = arith.constant 0 : i32
    %c0_i32_0 = arith.constant 0 : i32
    %c0_i32_1 = arith.constant 0 : i32
    return %arg0, %c0_i32, %c0_i32_0 : i32, i32, i32
  }
  func.func @transform_1(%arg0: i32) -> (i32, i32) {
    %c0_i32 = arith.constant 0 : i32
    %c0_i32_0 = arith.constant 0 : i32
    %c0_i32_1 = arith.constant 0 : i32
    return %c0_i32, %c0_i32_0 : i32, i32
  }
  func.func @transform_2(%arg0: i32) -> (i32, i32) {
    %c0_i32 = arith.constant 0 : i32
    %c0_i32_0 = arith.constant 0 : i32
    %c0_i32_1 = arith.constant 0 : i32
    return %c0_i32, %c0_i32_0 : i32, i32
  }
  func.func @transform_3(%arg0: i32) -> (i32, i32, i32) {
    %c0_i32 = arith.constant 0 : i32
    %c0_i32_0 = arith.constant 0 : i32
    %c0_i32_1 = arith.constant 0 : i32
    return %arg0, %c0_i32, %c0_i32_0 : i32, i32, i32
  }
}

</mosaic_0001>

<llo_original>
// kernel: tpu_custom_call.1
$region0: #{tpu_custom_call.1}
  #allocation0 [shape = 'u32[]', space=smem, size = 0x4, offset = 0x4, fixed_abs, tag = 'smem constant byte address 0x4 - core index']
  #allocation1 [shape = 'u32[144,128]{1,0:T(1,128)}', space=vmem, size = 0x12000, scoped, tag = 'internal scratch']
  %s0 = inlined_call_operand.vmem [shape: f32[2,17,64], index: 0, kind: input, shape index: {}]
  %s1 = inlined_call_operand.vmem [shape: f32[64,32], index: 1, kind: input, shape index: {}]
  %s2 = inlined_call_operand.vmem [shape: f32[17,32], index: 2, kind: input, shape index: {}]
  %s3 = inlined_call_operand.vmem [shape: f32[2,17,32], index: 3, kind: output, shape index: {}]
  %s4 = sld [smem:[#allocation0]]
  $region45: #{tpu_custom_call.1} parent=0
    _
  %s6 = ssub.s32 1, %s4
  %s7 = scalar_select 0, %s6, %s4
  loop: start=0, step=1, limit=4
  $region2: #{tpu_custom_call.1} parent=0 // loop_pre_header
    _
  $region3: #{tpu_custom_call.1} parent=0 // loop_header
    %s9 = sphi 0, %s13
    %p10 = scmp.ge.s32.totalorder %s9, 4
    %s19 = sphi 0, %s21
    %s22 = sphi 0, %s19
    %s23 = sphi 0, %s22
    %s39 = sphi 0, %s23
    %s43 = sphi 0, %s43
    %s45 = sphi 0, %s43
    %s46 = sphi 0, %s45
    %s60 = sphi 0, %s46
    %s64 = sphi 0, %s64
    %s66 = sphi 0, %s64
    %s67 = sphi 0, %s66
    %s81 = sphi 0, %s67
    %s87 = sphi 0, %s89
    %s90 = sphi 0, %s87
    %s91 = sphi 0, %s90
    %s107 = sphi 0, %s91
  $region4: #{tpu_custom_call.1} parent=0 // loop_header_branch
    %12 = sbr.rel (%p10) target = $region8
  $region5: #{tpu_custom_call.1} parent=0 // loop_body
    %s14 = ssub.s32 %s9, 1
    %s15 = ssub.s32 %s9, 2
    %s16 = sadd.s32 %s9, 1
    %s17 = ssub.s32 %s9, %s16
    %p18 = scmp.eq.s32.totalorder %s17, 0
    %s20 = sadd.s32 %s19, 1
    %s21 = scalar_select %p18, %s19, %s20
    %p24 = pneg %p18
    %p25 = scmp.eq.s32.totalorder %s9, 1
    %p26 = por %p24, %p25
    %p27 = scmp.ne.s32.totalorder %s19, %s22
    %p28 = scmp.eq.s32.totalorder %s9, 0
    %p29 = por %p27, %p28
    %p30 = scmp.ne.s32.totalorder %s19, %s22
    %p31 = scmp.eq.s32.totalorder %s14, 1
    %p32 = por %p30, %p31
    %p33 = scmp.ne.s32.totalorder %s22, %s23
    %p34 = scmp.eq.s32.totalorder %s14, 0
    %p35 = por %p33, %p34
    %p36 = scmp.ne.s32.totalorder %s22, %s23
    %p37 = scmp.eq.s32.totalorder %s15, 1
    %p38 = por %p36, %p37
    %p40 = scmp.ne.s32.totalorder %s23, %s39
    %p41 = scmp.eq.s32.totalorder %s15, 0
    %p42 = por %p40, %p41
    %s44 = sadd.s32 %s43, 1
    %p47 = scmp.eq.s32.totalorder %s9, 1
    %p48 = scmp.ne.s32.totalorder %s43, %s45
    %p49 = scmp.eq.s32.totalorder %s9, 0
    %p50 = por %p48, %p49
    %p51 = scmp.ne.s32.totalorder %s43, %s45
    %p52 = scmp.eq.s32.totalorder %s14, 1
    %p53 = por %p51, %p52
    %p54 = scmp.ne.s32.totalorder %s45, %s46
    %p55 = scmp.eq.s32.totalorder %s14, 0
    %p56 = por %p54, %p55
    %p57 = scmp.ne.s32.totalorder %s45, %s46
    %p58 = scmp.eq.s32.totalorder %s15, 1
    %p59 = por %p57, %p58
    %p61 = scmp.ne.s32.totalorder %s46, %s60
    %p62 = scmp.eq.s32.totalorder %s15, 0
    %p63 = por %p61, %p62
    %s65 = sadd.s32 %s64, 1
    %p68 = scmp.eq.s32.totalorder %s9, 1
    %p69 = scmp.ne.s32.totalorder %s64, %s66
    %p70 = scmp.eq.s32.totalorder %s9, 0
    %p71 = por %p69, %p70
    %p72 = scmp.ne.s32.totalorder %s64, %s66
    %p73 = scmp.eq.s32.totalorder %s14, 1
    %p74 = por %p72, %p73
    %p75 = scmp.ne.s32.totalorder %s66, %s67
    %p76 = scmp.eq.s32.totalorder %s14, 0
    %p77 = por %p75, %p76
    %p78 = scmp.ne.s32.totalorder %s66, %s67
    %p79 = scmp.eq.s32.totalorder %s15, 1
    %p80 = por %p78, %p79
    %p82 = scmp.ne.s32.totalorder %s67, %s81
    %p83 = scmp.eq.s32.totalorder %s15, 0
    %p84 = por %p82, %p83
    %s85 = ssub.s32 %s9, %s16
    %p86 = scmp.eq.s32.totalorder %s85, 0
    %s88 = sadd.s32 %s87, 1
    %s89 = scalar_select %p86, %s87, %s88
    %p92 = pneg %p86
    %p93 = scmp.eq.s32.totalorder %s9, 1
    %p94 = por %p92, %p93
    %p95 = scmp.ne.s32.totalorder %s87, %s90
    %p96 = scmp.eq.s32.totalorder %s9, 0
    %p97 = por %p95, %p96
    %p98 = scmp.ne.s32.totalorder %s87, %s90
    %p99 = scmp.eq.s32.totalorder %s14, 1
    %p100 = por %p98, %p99
    %p101 = scmp.ne.s32.totalorder %s90, %s91
    %p102 = scmp.eq.s32.totalorder %s14, 0
    %p103 = por %p101, %p102
    %p104 = scmp.ne.s32.totalorder %s90, %s91
    %p105 = scmp.eq.s32.totalorder %s15, 1
    %p106 = por %p104, %p105
    %p108 = scmp.ne.s32.totalorder %s91, %s107
    %p109 = scmp.eq.s32.totalorder %s15, 0
    %p110 = por %p108, %p109
    %p111 = scmp.le.s32.totalorder 1, %s9
    %p112 = scmp.lt.s32.totalorder %s9, 3
    %p113 = pnand %p111, %p112
    %p114 = pneg %p113
    // Predicated region
    $region9: #{tpu_custom_call.1} parent=5 // pred_check
      _
    $region10: #{tpu_custom_call.1} parent=5 // pred_check_branch
      %116 = sbr.rel (%p113) target = $region12
    $region11: #{tpu_custom_call.1} parent=5 // pred_region
      %s117 = ssub.s32 %s9, 1
      // Predicated region
      $region13: #{tpu_custom_call.1} parent=11 // pred_check
        %p118 = pneg %p56
      $region14: #{tpu_custom_call.1} parent=11 // pred_check_branch
        %120 = sbr.rel (%p118) target = $region16
      $region15: #{tpu_custom_call.1} parent=11 // pred_region
        _
      $region16: #{tpu_custom_call.1} parent=11 // pred_fallthru
        _
      // Predicated region
      $region17: #{tpu_custom_call.1} parent=11 // pred_check
        %p121 = pneg %p77
      $region18: #{tpu_custom_call.1} parent=11 // pred_check_branch
        %123 = sbr.rel (%p121) target = $region20
      $region19: #{tpu_custom_call.1} parent=11 // pred_region
        _
      $region20: #{tpu_custom_call.1} parent=11 // pred_fallthru
        _
    $region12: #{tpu_custom_call.1} parent=5 // pred_fallthru
      _
    %p124 = scmp.lt.s32.totalorder %s9, 2
    // Predicated region
    $region21: #{tpu_custom_call.1} parent=5 // pred_check
      %p125 = pneg %p124
    $region22: #{tpu_custom_call.1} parent=5 // pred_check_branch
      %127 = sbr.rel (%p125) target = $region24
    $region23: #{tpu_custom_call.1} parent=5 // pred_region
      // Predicated region
      $region25: #{tpu_custom_call.1} parent=23 // pred_check
        %p128 = pneg %p29
      $region26: #{tpu_custom_call.1} parent=23 // pred_check_branch
        %130 = sbr.rel (%p128) target = $region28
      $region27: #{tpu_custom_call.1} parent=23 // pred_region
        %p131 = scmp.lt.s32.totalorder %s9, 1
        %s132 = scalar_select %p131, %s9, 1
        %s133 = smul.addr %s132, 3
        %s134 = smul.addr %s133, 8
        %s135 = scalar_lea.vmem %s0, %s134
      $region28: #{tpu_custom_call.1} parent=23 // pred_fallthru
        _
    $region24: #{tpu_custom_call.1} parent=5 // pred_fallthru
      _
    %p136 = scmp.le.s32.totalorder 1, %s9
    %p137 = scmp.lt.s32.totalorder %s9, 3
    %p138 = pnand %p136, %p137
    %p139 = pneg %p138
    // Predicated region
    $region29: #{tpu_custom_call.1} parent=5 // pred_check
      _
    $region30: #{tpu_custom_call.1} parent=5 // pred_check_branch
      %141 = sbr.rel (%p138) target = $region32
    $region31: #{tpu_custom_call.1} parent=5 // pred_region
      %s142 = ssub.s32 %s9, 1
      %p143 = scmp.lt.s32.totalorder %s14, 1
      %s144 = scalar_select %p143, %s14, 1
      %s145 = smul.addr %s144, 3
      %s146 = smul.addr %s145, 8
      %s147 = scalar_lea.vmem %s0, %s146
      %p148 = pneg %p35
      %p149 = pneg %p32
      %p150 = pneg %p56
      %p151 = pneg %p53
      %p152 = pneg %p77
      %p153 = pneg %p74
      %p154 = pneg %p103
      %p155 = pneg %p100
      %p156 = scmp.lt.s32.totalorder %s14, 1
      %s157 = scalar_select %p156, %s14, 1
      %s158 = smul.addr %s157, 3
      %s159 = smul.addr %s158, 8
      %s160 = scalar_lea.vmem %s3, %s159
      %p161 = scmp.lt.s32.totalorder %s14, 1
      %s162 = scalar_select %p161, %s14, 1
      %s163 = smul.addr %s162, 3
      %s164 = smul.addr %s163, 8
      %s165 = scalar_lea.vmem %s0, %s164
      %p166 = scmp.lt.s32.totalorder %s14, 1
      %s167 = scalar_select %p166, %s14, 1
      %s168 = smul.addr %s167, 3
      %s169 = smul.addr %s168, 8
      %s170 = scalar_lea.vmem %s3, %s169
      %v171 = vld [vmem:[%s165] sm:$0xff]
      %v172 = vld [vmem:[%s165 + $0x8] sm:$0xff]
      %v173 = vld [vmem:[%s165 + $0x10] sm:$0x1]
      %v174 = vld [vmem:[%s1] sm:$0xff]
      %v175 = vld [vmem:[%s1 + $0x8] sm:$0xff]
      %v176 = vld [vmem:[%s1 + $0x10] sm:$0xff]
      %v177 = vld [vmem:[%s1 + $0x18] sm:$0xff]
      %v178 = vld [vmem:[%s1 + $0x20] sm:$0xff]
      %v179 = vld [vmem:[%s1 + $0x28] sm:$0xff]
      %v180 = vld [vmem:[%s1 + $0x30] sm:$0xff]
      %v181 = vld [vmem:[%s1 + $0x38] sm:$0xff]
      %v182 = vld [vmem:[%s2] sm:$0xff]
      %v183 = vld [vmem:[%s2 + $0x8] sm:$0xff]
      %v184 = vld [vmem:[%s2 + $0x10] sm:$0x1]
      %vm185 = vcmask 523264
      %v187 = vsel %vm185, %v171, 0
      %v190 = vsel %vm185, %v172, 0
      %v193 = vsel %vm185, %v173, 0
      %195 = vmatprep.subr.mxu0 0.0
      %196 = vmatpush1.msra.mxu0 %v174
      %197 = vmatprep.subr.mxu0 0.0
      %198 = vmatpush1.msra.mxu0 %v175
      %199 = vmatprep.subr.mxu0 0.0
      %200 = vmatpush1.msra.mxu0 %v176
      %201 = vmatprep.subr.mxu0 0.0
      %202 = vmatpush1.msra.mxu0 %v177
      %203 = vmatprep.subr.mxu0 0.0
      %204 = vmatpush1.msra.mxu0 %v178
      %205 = vmatprep.subr.mxu0 0.0
      %206 = vmatpush1.msra.mxu0 %v179
      %207 = vmatprep.subr.mxu0 0.0
      %208 = vmatpush1.msra.mxu0 %v180
      %209 = vmatprep.subr.mxu0 0.0
      %210 = vmatpush1.msra.mxu0 %v181
      %211 = vmatprep.subr.mxu0 0.0
      %212 = vmatpush1.msra.mxu0 0.0
      %213 = vmatprep.subr.mxu0 0.0
      %214 = vmatpush1.msra.mxu0 0.0
      %215 = vmatprep.subr.mxu0 0.0
      %216 = vmatpush1.msra.mxu0 0.0
      %217 = vmatprep.subr.mxu0 0.0
      %218 = vmatpush1.msra.mxu0 0.0
      %219 = vmatprep.subr.mxu0 0.0
      %220 = vmatpush1.msra.mxu0 0.0
      %221 = vmatprep.subr.mxu0 0.0
      %222 = vmatpush1.msra.mxu0 0.0
      %223 = vmatprep.subr.mxu0 0.0
      %224 = vmatpush1.msra.mxu0 0.0
      %225 = vmatprep.subr.mxu0 0.0
      %226 = vmatpush1.msra.mxu0 0.0
      %227 = vmatprep.subr.mxu0 0.0
      %228 = vmatpush1.msra.mxu0 0.0
      %229 = vmatprep.subr.mxu0 0.0
      %230 = vmatpush1.msra.mxu0 0.0
      %231 = vmatprep.subr.mxu0 0.0
      %232 = vmatpush1.msra.mxu0 0.0
      %233 = vmatprep.subr.mxu0 0.0
      %234 = vmatpush1.msra.mxu0 0.0
      %235 = vmatprep.subr.mxu0 0.0
      %236 = vmatpush1.msra.mxu0 0.0
      %237 = vmatprep.subr.mxu0 0.0
      %238 = vmatpush1.msra.mxu0 0.0
      %239 = vmatprep.subr.mxu0 0.0
      %240 = vmatpush1.msra.mxu0 0.0
      %241 = vmatprep.subr.mxu0 0.0
      %242 = vmatpush1.msra.mxu0 0.0
      %243 = vmatprep.subr.mxu0 0.0
      %244 = vmatpush1.msra.mxu0 0.0
      %245 = vmatprep.subr.mxu0 0.0
      %246 = vmatpush1.msra.mxu0 0.0
      %247 = vmatprep.subr.mxu0 0.0
      %248 = vmatpush1.msra.mxu0 0.0
      %249 = vmatprep.subr.mxu0 0.0
      %250 = vmatpush1.msra.mxu0 0.0
      %251 = vmatprep.subr.mxu0 0.0
      %252 = vmatpush1.msra.mxu0 0.0
      %253 = vmatprep.subr.mxu0 0.0
      %254 = vmatpush1.msra.mxu0 0.0
      %255 = vmatprep.subr.mxu0 0.0
      %256 = vmatpush1.msra.mxu0 0.0
      %257 = vmatprep.subr.mxu0 0.0
      %258 = vmatpush1.msra.mxu0 0.0
      %259 = vmatprep.mubr.f32.mxu0 0.0
      %260 = vmatmul.mubr.f32.gmra.mrb[0].mxu0 %v187
      %v261 = vpop.f32.mrb[0].mxu0
      %v262 = vadd.f32 %v182, %v261
      %v263 = vpop.f32.mrb[0].mxu0
      %264 = vmatprep.mubr.f32.mxu0 0.0
      %265 = vmatmul.mubr.f32.gmra.mrb[0].mxu0 %v190
      %v266 = vpop.f32.mrb[0].mxu0
      %v267 = vadd.f32 %v183, %v266
      %v268 = vpop.f32.mrb[0].mxu0
      %269 = vmatprep.mubr.f32.mxu0 0.0
      %270 = vmatmul.mubr.f32.gmra.mrb[0].mxu0 %v193
      %v271 = vpop.f32.mrb[0].mxu0
      %v272 = vadd.f32 %v184, %v271
      %v273 = vpop.f32.mrb[0].mxu0
      %274 = vdwg.mxu0
      %vm275 = vcmask 261120
      %276 = vst.msk [vmem:[%s170] sm:$0xff] %vm275, %v262
      %277 = vst.msk [vmem:[%s170 + $0x8] sm:$0xff] %vm275, %v267
      %vm278 = vcmask 253952
      %279 = vst.msk [vmem:[%s170 + $0x10] sm:$0x1] %vm278, %v272
      %p280 = scmp.lt.s32.totalorder %s14, 1
      %s281 = scalar_select %p280, %s14, 1
      %s282 = smul.addr %s281, 3
      %s283 = smul.addr %s282, 8
      %s284 = scalar_lea.vmem %s3, %s283
      // Predicated region
      $region33: #{tpu_custom_call.1} parent=31 // pred_check
        %p285 = pneg %p100
      $region34: #{tpu_custom_call.1} parent=31 // pred_check_branch
        %287 = sbr.rel (%p285) target = $region36
      $region35: #{tpu_custom_call.1} parent=31 // pred_region
        _
      $region36: #{tpu_custom_call.1} parent=31 // pred_fallthru
        _
    $region32: #{tpu_custom_call.1} parent=5 // pred_fallthru
      _
    %p288 = scmp.le.s32.totalorder 2, %s9
    // Predicated region
    $region37: #{tpu_custom_call.1} parent=5 // pred_check
      %p289 = pneg %p288
    $region38: #{tpu_custom_call.1} parent=5 // pred_check_branch
      %291 = sbr.rel (%p289) target = $region40
    $region39: #{tpu_custom_call.1} parent=5 // pred_region
      %s292 = ssub.s32 %s9, 2
      // Predicated region
      $region41: #{tpu_custom_call.1} parent=39 // pred_check
        %p293 = pneg %p106
      $region42: #{tpu_custom_call.1} parent=39 // pred_check_branch
        %295 = sbr.rel (%p293) target = $region44
      $region43: #{tpu_custom_call.1} parent=39 // pred_region
        %p296 = scmp.lt.s32.totalorder %s15, 1
        %s297 = scalar_select %p296, %s15, 1
        %s298 = smul.addr %s297, 3
        %s299 = smul.addr %s298, 8
        %s300 = scalar_lea.vmem %s3, %s299
      $region44: #{tpu_custom_call.1} parent=39 // pred_fallthru
        _
    $region40: #{tpu_custom_call.1} parent=5 // pred_fallthru
      _
  $region6: #{tpu_custom_call.1} parent=0 // loop_footer
    %s13 = sadd.s32 1, %s9
  $region7: #{tpu_custom_call.1} parent=0 // loop_footer_branch
    %8 = sbr.rel target = $region3
  $region8: #{tpu_custom_call.1} parent=0 // loop_exit
    _

</llo_original>
